<compile_context>
chip_gen: v7x
topology: tpu7x:2x2x1
jax: 0.10.0
libtpu: 0.0.40
codegen_flags: <defaults>
</compile_context>

<pallas_src>
import jax
import jax.numpy as jnp
from jax.experimental import pallas as pl
from jax.experimental.pallas import tpu as pltpu

_OUT_W = 8                      # padded output lane width (3 real columns)
_VMEM_BUDGET = 24 * 1024 * 1024  # target double-buffered working set
_VMEM_LIMIT = 48 * 1024 * 1024   # explicit scoped-VMEM limit (< v7x 64 MiB)


def _ceil_div(a, b):
    return -(-a // b)


def _classifier_kernel(x_ref, w_ref, b_ref, out_ref):
    # Single fused matmul for both heads: (tb, D) @ (D, 8) + (1, 8), f32
    # accumulate on the MXU, cast to the output dtype on store.
    acc = jnp.dot(x_ref[...], w_ref[...], preferred_element_type=jnp.float32)
    out_ref[...] = (acc + b_ref[...]).astype(out_ref.dtype)


def _pick_batch_tile(batch8, d, x_itemsize, out_itemsize):
    """VMEM- and dtype-aware batch tile (multiple of 8, <= batch8)."""
    # Double-buffered x tile + double-buffered output tile, per row of tile.
    per_row = 2 * d * x_itemsize + 2 * _OUT_W * out_itemsize
    # Resident fused weights + bias (double-buffered by default, but tiny).
    fixed = 2 * d * _OUT_W * x_itemsize + 2 * _OUT_W * 4
    avail = max(_VMEM_BUDGET - fixed, per_row * 8)
    tb = avail // per_row
    tb = min(tb, batch8)
    tb = max((tb // 8) * 8, 8)
    # Ensure >= 2 grid steps for larger batches so v7x's two TensorCores both
    # receive work (no effect on single-TC v5e/v6e).
    if batch8 >= 16 and _ceil_div(batch8, tb) < 2:
        tb = max(((batch8 // 2) // 8) * 8, 8)
    return tb


def _classifier_forward_impl(x, w_gender, b_gender, w_age, b_age):
    """x: (B, D); w_gender: (D, 2); b_gender: (2,); w_age: (D, 1); b_age: (1,)."""
    B, D = x.shape
    out_dtype = x.dtype
    x_itemsize = jnp.dtype(x.dtype).itemsize
    out_itemsize = jnp.dtype(out_dtype).itemsize

    # Fuse the two heads into one 8-lane slab (zeros in the unused columns).
    w_fused = jnp.concatenate([w_gender, w_age], axis=1).astype(x.dtype)   # (D, 3)
    w_pad = jnp.zeros((D, _OUT_W), dtype=x.dtype).at[:, :3].set(w_fused)    # (D, 8)
    b_fused = jnp.concatenate([b_gender, b_age], axis=0).astype(jnp.float32)  # (3,)
    b_pad = jnp.zeros((1, _OUT_W), dtype=jnp.float32).at[:, :3].set(b_fused)  # (1, 8)

    # Batch tiling: round B up to a multiple of 8, pick a VMEM-budgeted tile,
    # then zero-pad B up to a multiple of the tile (keeps pipelining for
    # ragged batches instead of a single whole-array block).
    B8 = _ceil_div(B, 8) * 8
    tb = _pick_batch_tile(B8, D, x_itemsize, out_itemsize)
    n_steps = _ceil_div(B8, tb)
    B_pad = n_steps * tb
    if B_pad != B:
        x_p = jnp.zeros((B_pad, D), dtype=x.dtype).at[:B, :].set(x)
    else:
        x_p = x

    y = pl.pallas_call(
        _classifier_kernel,
        out_shape=jax.ShapeDtypeStruct((B_pad, _OUT_W), out_dtype),
        grid=(n_steps,),
        in_specs=[
            pl.BlockSpec((tb, D), lambda i: (i, 0)),        # x tile (pipelined)
            pl.BlockSpec((D, _OUT_W), lambda i: (0, 0)),    # fused weights (resident)
            pl.BlockSpec((1, _OUT_W), lambda i: (0, 0)),    # fused bias (resident)
        ],
        out_specs=pl.BlockSpec((tb, _OUT_W), lambda i: (i, 0)),
        compiler_params=pltpu.CompilerParams(
            dimension_semantics=("parallel",),
            vmem_limit_bytes=_VMEM_LIMIT,
        ),
        cost_estimate=pl.CostEstimate(
            flops=2 * B_pad * D * _OUT_W,
            transcendentals=0,
            bytes_accessed=(B_pad * D * x_itemsize
                            + B_pad * _OUT_W * out_itemsize
                            + D * _OUT_W * x_itemsize),
        ),
    )(x_p, w_pad, b_pad)

    gender_guess = y[:B, 0:2]
    age_guess = y[:B, 2:3]
    return gender_guess, age_guess


# jit so the head fusion, padding and output slicing are compiled once with
# the kernel instead of dispatching as separate eager XLA programs per call.
classifier_forward = jax.jit(_classifier_forward_impl)


if __name__ == "__main__":
    key = jax.random.PRNGKey(0)
    batch = 8
    input_size = 32

    k_x, k_wg, k_bg, k_wa, k_ba, k_wu, k_bu = jax.random.split(key, 7)

    x = jax.random.normal(k_x, (batch, input_size), dtype=jnp.float32)

    # Deterministic parameter init mimicking nn.Linear's U(-1/sqrt(in), 1/sqrt(in)).
    bound = 1.0 / (input_size ** 0.5)
    # PyTorch stores weight as (out, in); we keep the transposed (in, out) form.
    w_gender = jax.random.uniform(k_wg, (input_size, 2), minval=-bound, maxval=bound)
    b_gender = jax.random.uniform(k_bg, (2,), minval=-bound, maxval=bound)
    w_age = jax.random.uniform(k_wa, (input_size, 1), minval=-bound, maxval=bound)
    b_age = jax.random.uniform(k_ba, (1,), minval=-bound, maxval=bound)
    # `user` head exists in __init__ but is unused in forward; not part of the pass.
    w_user = jax.random.uniform(k_wu, (input_size, 100), minval=-bound, maxval=bound)
    b_user = jax.random.uniform(k_bu, (100,), minval=-bound, maxval=bound)
    del w_user, b_user

    gender_guess, age_guess = classifier_forward(x, w_gender, b_gender, w_age, b_age)
    jax.block_until_ready((gender_guess, age_guess))

    # Reference check in plain JAX.
    ref_gender = x @ w_gender + b_gender
    ref_age = x @ w_age + b_age
    assert gender_guess.shape == (batch, 2)
    assert age_guess.shape == (batch, 1)
    assert jnp.allclose(gender_guess, ref_gender, atol=1e-5, rtol=1e-5)
    assert jnp.allclose(age_guess, ref_age, atol=1e-5, rtol=1e-5)

    print("KERNEL_OK")
</pallas_src>

<mosaic_0001>
module attributes {stable_mosaic.version = 11 : i64} {
  func.func @_classifier_kernel(%arg0: i32, %arg1: memref<8x32xf32, #tpu.memory_space<vmem>>, %arg2: memref<32x8xf32, #tpu.memory_space<vmem>>, %arg3: memref<1x8xf32, #tpu.memory_space<vmem>>, %arg4: memref<8x8xf32, #tpu.memory_space<vmem>>) attributes {dimension_semantics = [#tpu.dimension_semantics<parallel>], iteration_bounds = array<i64: 1>, scalar_prefetch = 0 : i64, scratch_operands = 0 : i64, tpu.core_type = #tpu.core_type<tc>, window_params = [{transform_indices = @transform_0, window_bounds = array<i64: 8, 32>}, {pipeline_mode = #tpu.pipeline_mode<synchronous>, transform_indices = @transform_1, window_bounds = array<i64: 32, 8>}, {pipeline_mode = #tpu.pipeline_mode<synchronous>, transform_indices = @transform_2, window_bounds = array<i64: 1, 8>}, {transform_indices = @transform_3, window_bounds = array<i64: 8, 8>}]} {
    %c0 = arith.constant 0 : index
    %c0_0 = arith.constant 0 : index
    %0 = vector.load %arg1[%c0, %c0_0] : memref<8x32xf32, #tpu.memory_space<vmem>>, vector<8x32xf32>
    %c0_1 = arith.constant 0 : index
    %c0_2 = arith.constant 0 : index
    %1 = vector.load %arg2[%c0_1, %c0_2] : memref<32x8xf32, #tpu.memory_space<vmem>>, vector<32x8xf32>
    %cst = arith.constant dense<0.000000e+00> : vector<8x8xf32>
    %2 = tpu.matmul %0, %1, %cst {dimension_numbers = #tpu.dot_dimension_numbers<[1], [0], [0], [1], [0, 0, 1, 1], [], []>} : vector<8x32xf32>, vector<32x8xf32>, vector<8x8xf32> -> vector<8x8xf32>
    %c0_3 = arith.constant 0 : index
    %c0_4 = arith.constant 0 : index
    %3 = vector.load %arg3[%c0_3, %c0_4] : memref<1x8xf32, #tpu.memory_space<vmem>>, vector<1x8xf32>
    %4 = vector.broadcast %3 : vector<1x8xf32> to vector<8x8xf32>
    %5 = arith.addf %2, %4 : vector<8x8xf32>
    %c0_5 = arith.constant 0 : index
    %c0_6 = arith.constant 0 : index
    %6 = vector.load %arg4[%c0_5, %c0_6] : memref<8x8xf32, #tpu.memory_space<vmem>>, vector<8x8xf32>
    tpu.vector_store %arg4[%c0_5, %c0_6], %5 {strides = array<i32>} : memref<8x8xf32, #tpu.memory_space<vmem>>, vector<8x8xf32>,
    return
  }
  func.func @transform_0(%arg0: i32) -> (i32, i32) {
    %c0_i32 = arith.constant 0 : i32
    %c0_i32_0 = arith.constant 0 : i32
    return %arg0, %c0_i32 : i32, i32
  }
  func.func @transform_1(%arg0: i32) -> (i32, i32) {
    %c0_i32 = arith.constant 0 : i32
    %c0_i32_0 = arith.constant 0 : i32
    %c0_i32_1 = arith.constant 0 : i32
    return %c0_i32, %c0_i32_0 : i32, i32
  }
  func.func @transform_2(%arg0: i32) -> (i32, i32) {
    %c0_i32 = arith.constant 0 : i32
    %c0_i32_0 = arith.constant 0 : i32
    %c0_i32_1 = arith.constant 0 : i32
    return %c0_i32, %c0_i32_0 : i32, i32
  }
  func.func @transform_3(%arg0: i32) -> (i32, i32) {
    %c0_i32 = arith.constant 0 : i32
    %c0_i32_0 = arith.constant 0 : i32
    return %arg0, %c0_i32 : i32, i32
  }
}

</mosaic_0001>

<llo_original>
// kernel: _classifier_forward_impl.1
$region0: #{_classifier_forward_impl.1}
  #allocation0 [shape = 'u32[]', space=smem, size = 0x4, offset = 0x4, fixed_abs, tag = 'smem constant byte address 0x4 - core index']
  #allocation1 [shape = 'u32[144,128]{1,0:T(1,128)}', space=vmem, size = 0x12000, scoped, tag = 'internal scratch']
  %s0 = inlined_call_operand.vmem [shape: f32[8,32], index: 0, kind: input, shape index: {}]
  %s1 = inlined_call_operand.vmem [shape: f32[32,8], index: 1, kind: input, shape index: {}]
  %s2 = inlined_call_operand.vmem [shape: f32[1,8], index: 2, kind: input, shape index: {}]
  %s3 = inlined_call_operand.vmem [shape: f32[8,8], index: 3, kind: output, shape index: {}]
  %s4 = sld [smem:[#allocation0]]
  $region22: #{_classifier_forward_impl.1} parent=0
    _
  %s6 = ssub.s32 1, %s4
  %s7 = scalar_select 0, %s6, %s4
  // Predicated region
  $region2: #{_classifier_forward_impl.1} parent=0 // pred_check
    _
  $region3: #{_classifier_forward_impl.1} parent=0 // pred_check_branch
    %9 = sbr.rel (0) target = $region5
  $region4: #{_classifier_forward_impl.1} parent=0 // pred_region
    _
  $region5: #{_classifier_forward_impl.1} parent=0 // pred_fallthru
    _
  // Predicated region
  $region6: #{_classifier_forward_impl.1} parent=0 // pred_check
    _
  $region7: #{_classifier_forward_impl.1} parent=0 // pred_check_branch
    %11 = sbr.rel (0) target = $region9
  $region8: #{_classifier_forward_impl.1} parent=0 // pred_region
    _
  $region9: #{_classifier_forward_impl.1} parent=0 // pred_fallthru
    _
  // Predicated region
  $region10: #{_classifier_forward_impl.1} parent=0 // pred_check
    _
  $region11: #{_classifier_forward_impl.1} parent=0 // pred_check_branch
    %13 = sbr.rel (0) target = $region13
  $region12: #{_classifier_forward_impl.1} parent=0 // pred_region
    _
  $region13: #{_classifier_forward_impl.1} parent=0 // pred_fallthru
    _
  %v14 = vld [vmem:[%s0] sm:$0xff]
  %v15 = vld [vmem:[%s1] sm:$0xff]
  %v16 = vld [vmem:[%s1 + $0x8] sm:$0xff]
  %v17 = vld [vmem:[%s1 + $0x10] sm:$0xff]
  %v18 = vld [vmem:[%s1 + $0x18] sm:$0xff]
  %v19 = vld [vmem:[%s2] sm:$0x1]
  %v21 = vlaneseq
  %v22 = vshrl.u32 %v21, 7
  %v23 = vsub.s32 0, %v22
  %v24 = vrot.slane %v19, %v23
  %vm26 = vcmask 261120
  %v28 = vsel %vm26, %v14, 0
  %30 = vmatprep.subr.mxu0 0.0
  %31 = vmatpush1.msra.mxu0 %v15
  %32 = vmatprep.subr.mxu0 0.0
  %33 = vmatpush1.msra.mxu0 %v16
  %34 = vmatprep.subr.mxu0 0.0
  %35 = vmatpush1.msra.mxu0 %v17
  %36 = vmatprep.subr.mxu0 0.0
  %37 = vmatpush1.msra.mxu0 %v18
  %38 = vmatprep.subr.mxu0 0.0
  %39 = vmatpush1.msra.mxu0 0.0
  %40 = vmatprep.subr.mxu0 0.0
  %41 = vmatpush1.msra.mxu0 0.0
  %42 = vmatprep.subr.mxu0 0.0
  %43 = vmatpush1.msra.mxu0 0.0
  %44 = vmatprep.subr.mxu0 0.0
  %45 = vmatpush1.msra.mxu0 0.0
  %46 = vmatprep.subr.mxu0 0.0
  %47 = vmatpush1.msra.mxu0 0.0
  %48 = vmatprep.subr.mxu0 0.0
  %49 = vmatpush1.msra.mxu0 0.0
  %50 = vmatprep.subr.mxu0 0.0
  %51 = vmatpush1.msra.mxu0 0.0
  %52 = vmatprep.subr.mxu0 0.0
  %53 = vmatpush1.msra.mxu0 0.0
  %54 = vmatprep.subr.mxu0 0.0
  %55 = vmatpush1.msra.mxu0 0.0
  %56 = vmatprep.subr.mxu0 0.0
  %57 = vmatpush1.msra.mxu0 0.0
  %58 = vmatprep.subr.mxu0 0.0
  %59 = vmatpush1.msra.mxu0 0.0
  %60 = vmatprep.subr.mxu0 0.0
  %61 = vmatpush1.msra.mxu0 0.0
  %62 = vmatprep.subr.mxu0 0.0
  %63 = vmatpush1.msra.mxu0 0.0
  %64 = vmatprep.subr.mxu0 0.0
  %65 = vmatpush1.msra.mxu0 0.0
  %66 = vmatprep.subr.mxu0 0.0
  %67 = vmatpush1.msra.mxu0 0.0
  %68 = vmatprep.subr.mxu0 0.0
  %69 = vmatpush1.msra.mxu0 0.0
  %70 = vmatprep.subr.mxu0 0.0
  %71 = vmatpush1.msra.mxu0 0.0
  %72 = vmatprep.subr.mxu0 0.0
  %73 = vmatpush1.msra.mxu0 0.0
  %74 = vmatprep.subr.mxu0 0.0
  %75 = vmatpush1.msra.mxu0 0.0
  %76 = vmatprep.subr.mxu0 0.0
  %77 = vmatpush1.msra.mxu0 0.0
  %78 = vmatprep.subr.mxu0 0.0
  %79 = vmatpush1.msra.mxu0 0.0
  %80 = vmatprep.subr.mxu0 0.0
  %81 = vmatpush1.msra.mxu0 0.0
  %82 = vmatprep.subr.mxu0 0.0
  %83 = vmatpush1.msra.mxu0 0.0
  %84 = vmatprep.subr.mxu0 0.0
  %85 = vmatpush1.msra.mxu0 0.0
  %86 = vmatprep.subr.mxu0 0.0
  %87 = vmatpush1.msra.mxu0 0.0
  %88 = vmatprep.subr.mxu0 0.0
  %89 = vmatpush1.msra.mxu0 0.0
  %90 = vmatprep.subr.mxu0 0.0
  %91 = vmatpush1.msra.mxu0 0.0
  %92 = vmatprep.subr.mxu0 0.0
  %93 = vmatpush1.msra.mxu0 0.0
  %94 = vmatprep.mubr.f32.mxu0 0.0
  %95 = vmatmul.mubr.f32.gmra.mrb[0].mxu0 %v28
  %v96 = vpop.f32.mrb[0].mxu0
  %v97 = vadd.f32 %v24, %v96
  %v98 = vpop.f32.mrb[0].mxu0
  %99 = vdwg.mxu0
  %vm100 = vcmask 64512
  %101 = vst.msk [vmem:[%s3] sm:$0xff] %vm100, %v97
  // Predicated region
  $region14: #{_classifier_forward_impl.1} parent=0 // pred_check
    _
  $region15: #{_classifier_forward_impl.1} parent=0 // pred_check_branch
    %103 = sbr.rel (0) target = $region17
  $region16: #{_classifier_forward_impl.1} parent=0 // pred_region
    _
  $region17: #{_classifier_forward_impl.1} parent=0 // pred_fallthru
    _
  // Predicated region
  $region18: #{_classifier_forward_impl.1} parent=0 // pred_check
    _
  $region19: #{_classifier_forward_impl.1} parent=0 // pred_check_branch
    %105 = sbr.rel (0) target = $region21
  $region20: #{_classifier_forward_impl.1} parent=0 // pred_region
    _
  $region21: #{_classifier_forward_impl.1} parent=0 // pred_fallthru
    _

</llo_original>
